<compile_context>
chip_gen: v7x
topology: tpu7x:2x2x1
jax: 0.10.0
libtpu: 0.0.40
codegen_flags: <defaults>
</compile_context>

<pallas_src>
import functools

import jax
import jax.numpy as jnp
from jax.experimental import pallas as pl
from jax.experimental.pallas import tpu as pltpu

_LANES = 128
_SUBLANES = 8

# ----------------------------------------------------------------------------
# VMEM budget (generation aware: v7x has 64 MiB/TC vs 128 MiB on v5e/v6e).
# ----------------------------------------------------------------------------
_VMEM_BUDGET_CACHE = []


def _vmem_budget_bytes():
    if _VMEM_BUDGET_CACHE:
        return _VMEM_BUDGET_CACHE[0]
    try:
        phys = int(pltpu.get_tpu_info().vmem_capacity_bytes)
    except Exception:  # conservative fallback = v7x per-TC VMEM
        phys = 64 * 1024 * 1024
    budget = max(32 * 1024 * 1024, min(phys * 3 // 4, 96 * 1024 * 1024))
    _VMEM_BUDGET_CACHE.append(budget)
    return budget


def _select_tiles(r, l, itemsize, budget):
    """Pick (tile_r, tile_l) for the flattened (R = N*C, L) layout.

    tile_l is a multiple of 128 that divides L (stats correctness, lane-dense
    DMA); tile_r is a multiple of 8 (sublane-dense).  Both are sized so the
    apply pass (x-in + out, double-buffered) stays inside the VMEM budget.
    """
    block_budget = budget // 5  # ~4 large double-buffered blocks + slack
    if l % _LANES == 0:
        tile_l = min(l, 8192)
        while l % tile_l or (tile_l > _LANES and
                             _SUBLANES * tile_l * itemsize > block_budget):
            tile_l -= _LANES
    else:
        # Full-extent L block (always legal).  TODO(synk): for huge non-128-
        # aligned L this can exceed the VMEM budget; a masked remainder tile
        # would be needed to split it.
        tile_l = l
    max_r = max(_SUBLANES, block_budget // max(1, tile_l * itemsize))
    if r <= max_r:
        tile_r = r
    else:
        tile_r = max(_SUBLANES, (max_r // _SUBLANES) * _SUBLANES)
    return tile_r, tile_l


# ----------------------------------------------------------------------------
# Fused resident-x path (small tensors): stats + apply in one kernel.
# ----------------------------------------------------------------------------
def _fused_kernel(x_ref, a_ref, b_ref, gamma_ref, beta_ref, o_ref, *, eps,
                  inv_count):
    x = x_ref[...].astype(jnp.float32)                         # (N, C, L)
    mean = jnp.sum(jnp.sum(x, axis=2, keepdims=True),
                   axis=0, keepdims=True) * inv_count          # (1, C, 1)
    xc = x - mean                                              # centered var
    var = jnp.sum(jnp.sum(xc * xc, axis=2, keepdims=True),
                  axis=0, keepdims=True) * inv_count
    inv_std = jax.lax.rsqrt(var + eps)
    gs = gamma_ref[...].astype(jnp.float32) * inv_std          # (1, C, 1)
    a = a_ref[...].astype(jnp.float32)                         # (N, C, 1)
    b = b_ref[...].astype(jnp.float32)
    scale = a + b * gs
    shift = b * (beta_ref[...].astype(jnp.float32) - mean * gs)
    o_ref[...] = (x * scale + shift).astype(o_ref.dtype)


# ----------------------------------------------------------------------------
# Tiled pass 1: per-row sum / sum-of-squares on the flattened (R, L) layout.
# ----------------------------------------------------------------------------
def _stats_kernel(x_ref, sum_ref, sumsq_ref, *, groups):
    @pl.when(pl.program_id(1) == 0)
    def _():
        sum_ref[...] = jnp.zeros_like(sum_ref)
        sumsq_ref[...] = jnp.zeros_like(sumsq_ref)

    if groups:
        # Lane-partial accumulation: VPU adds of 128-lane column groups (static
        # aligned slices are free views); cross-lane reduce deferred to glue.
        s = sum_ref[...]
        q = sumsq_ref[...]
        for g in range(groups):
            xg = x_ref[:, g * _LANES:(g + 1) * _LANES].astype(jnp.float32)
            s = s + xg
            q = q + xg * xg
        sum_ref[...] = s
        sumsq_ref[...] = q
    else:
        # Single, non-128-aligned L tile: do the lane reduce here.
        x = x_ref[...].astype(jnp.float32)
        sum_ref[...] += jnp.sum(x, axis=-1, keepdims=True)
        sumsq_ref[...] += jnp.sum(x * x, axis=-1, keepdims=True)


# ----------------------------------------------------------------------------
# Tiled pass 2: out = scale * x + shift (one FMA per element).
# ----------------------------------------------------------------------------
def _apply_kernel(x_ref, scale_ref, shift_ref, o_ref):
    # Compute dtype follows scale/shift: f32 for f32 x, bf16 for bf16 x.
    o_ref[...] = (x_ref[...] * scale_ref[...] + shift_ref[...]).astype(o_ref.dtype)


@functools.partial(jax.jit, static_argnames=("eps", "force_tiled"))
def adaptive_batch_norm_1d(x, params, gamma, beta, *, eps=1e-5,
                           force_tiled=False):
    """x: (N, C, L), params: (N, 2*C), gamma/beta: (C,)."""
    n, c, l = x.shape
    assert params.shape == (n, 2 * c)
    r = n * c
    itemsize = x.dtype.itemsize
    budget = _vmem_budget_bytes()

    # ------------------ fused resident-x path (small tensors) ----------------
    fused_bytes = r * l * (2 * itemsize + 16)  # x + out + ~4 f32 temporaries
    if not force_tiled and fused_bytes <= budget // 2:
        kern = functools.partial(_fused_kernel, eps=float(eps),
                                 inv_count=1.0 / float(n * l))
        return pl.pallas_call(
            kern,
            out_shape=jax.ShapeDtypeStruct((n, c, l), x.dtype),
            compiler_params=pltpu.CompilerParams(vmem_limit_bytes=budget),
        )(x,
          params[:, :c].reshape(n, c, 1),
          params[:, c:].reshape(n, c, 1),
          gamma.reshape(1, c, 1),
          beta.reshape(1, c, 1))

    # ------------------ tiled two-pass path (flattened (R, L)) ---------------
    tile_r, tile_l = _select_tiles(r, l, itemsize, budget)
    n_rt = pl.cdiv(r, tile_r)
    n_lt = l // tile_l                      # tile_l divides L by construction
    groups = tile_l // _LANES if tile_l % _LANES == 0 else 0
    w = _LANES if groups else 1

    x2 = x.reshape(r, l)

    sums, sumsqs = pl.pallas_call(
        functools.partial(_stats_kernel, groups=groups),
        out_shape=(jax.ShapeDtypeStruct((r, w), jnp.float32),
                   jax.ShapeDtypeStruct((r, w), jnp.float32)),
        grid=(n_rt, n_lt),
        in_specs=[pl.BlockSpec((tile_r, tile_l), lambda i, j: (i, j))],
        out_specs=(pl.BlockSpec((tile_r, w), lambda i, j: (i, 0)),
                   pl.BlockSpec((tile_r, w), lambda i, j: (i, 0))),
        compiler_params=pltpu.CompilerParams(
            dimension_semantics=("parallel", "arbitrary"),
            vmem_limit_bytes=budget),
    )(x2)

    # ---- tiny (N, C) glue: BN stats + adaptive affine -> one scale/shift ----
    count = jnp.float32(n * l)
    ch_sum = sums.sum(axis=1).reshape(n, c).sum(axis=0)        # (C,)
    ch_sumsq = sumsqs.sum(axis=1).reshape(n, c).sum(axis=0)    # (C,)
    mean = ch_sum / count
    # TODO(synk): E[x^2]-E[x]^2 in f32 can lose accuracy for very large N*L with
    # |mean| >> std; a centered second stats pass would fix it at extra HBM cost.
    var = jnp.maximum(ch_sumsq / count - mean * mean, 0.0)
    inv_std = jax.lax.rsqrt(var + jnp.float32(eps))
    gs = gamma.astype(jnp.float32) * inv_std                   # (C,)
    a = params[:, :c].astype(jnp.float32)                      # (N, C)
    b = params[:, c:].astype(jnp.float32)
    scale = a + b * gs[None, :]                                # (N, C)
    shift = b * (beta.astype(jnp.float32) - mean * gs)[None, :]
    if x.dtype == jnp.bfloat16:   # keep the per-element FMA narrow on v6e/v7x
        scale = scale.astype(jnp.bfloat16)
        shift = shift.astype(jnp.bfloat16)
    scale = scale.reshape(r, 1)
    shift = shift.reshape(r, 1)

    out = pl.pallas_call(
        _apply_kernel,
        out_shape=jax.ShapeDtypeStruct((r, l), x.dtype),
        grid=(n_rt, n_lt),
        in_specs=[pl.BlockSpec((tile_r, tile_l), lambda i, j: (i, j)),
                  pl.BlockSpec((tile_r, 1), lambda i, j: (i, 0)),
                  pl.BlockSpec((tile_r, 1), lambda i, j: (i, 0))],
        out_specs=pl.BlockSpec((tile_r, tile_l), lambda i, j: (i, j)),
        compiler_params=pltpu.CompilerParams(
            dimension_semantics=("parallel", "parallel"),
            vmem_limit_bytes=budget),
    )(x2, scale, shift)
    return out.reshape(n, c, l)


def _reference(x, params, gamma, beta, eps=1e-5):
    n, c, l = x.shape
    a = params[:, :c][:, :, None]
    b = params[:, c:][:, :, None]
    mean = jnp.mean(x, axis=(0, 2), keepdims=True)
    var = jnp.mean((x - mean) ** 2, axis=(0, 2), keepdims=True)
    xn = (x - mean) / jnp.sqrt(var + eps) * gamma.reshape(1, c, 1) \
        + beta.reshape(1, c, 1)
    return a * x + b * xn


if __name__ == "__main__":
    key = jax.random.PRNGKey(0)

    # Primary small shape implied by the module -> fused resident-x path.
    N, C, L = 2, 4, 16
    k1, k2 = jax.random.split(key)
    x = jax.random.normal(k1, (N, C, L), dtype=jnp.float32)
    params = jax.random.normal(k2, (N, 2 * C), dtype=jnp.float32)
    gamma = jnp.ones((C,), dtype=jnp.float32)   # PyTorch BN init: weight=1
    beta = jnp.zeros((C,), dtype=jnp.float32)   # PyTorch BN init: bias=0
    out = jax.block_until_ready(adaptive_batch_norm_1d(x, params, gamma, beta))
    assert out.shape == (N, C, L)
    assert jnp.allclose(out, _reference(x, params, gamma, beta),
                        atol=1e-4, rtol=1e-4)

    # Tiled two-pass path with a 128-aligned L (lane-partial stats path).
    N2, C2, L2 = 2, 8, 1024
    k3, k4 = jax.random.split(k2)
    x2 = jax.random.normal(k3, (N2, C2, L2), dtype=jnp.float32)
    params2 = jax.random.normal(k4, (N2, 2 * C2), dtype=jnp.float32)
    gamma2 = jnp.ones((C2,), dtype=jnp.float32)
    beta2 = jnp.zeros((C2,), dtype=jnp.float32)
    out2 = jax.block_until_ready(
        adaptive_batch_norm_1d(x2, params2, gamma2, beta2, force_tiled=True))
    assert jnp.allclose(out2, _reference(x2, params2, gamma2, beta2),
                        atol=1e-4, rtol=1e-4)

    # Tiled path with a non-128-aligned L (full-extent L block, lane reduce).
    N3, C3, L3 = 2, 4, 300
    k5, k6 = jax.random.split(k4)
    x3 = jax.random.normal(k5, (N3, C3, L3), dtype=jnp.float32)
    params3 = jax.random.normal(k6, (N3, 2 * C3), dtype=jnp.float32)
    gamma3 = jnp.ones((C3,), dtype=jnp.float32)
    beta3 = jnp.zeros((C3,), dtype=jnp.float32)
    out3 = jax.block_until_ready(
        adaptive_batch_norm_1d(x3, params3, gamma3, beta3, force_tiled=True))
    assert jnp.allclose(out3, _reference(x3, params3, gamma3, beta3),
                        atol=1e-4, rtol=1e-4)

    print("KERNEL_OK")
</pallas_src>

<mosaic_0001>
module attributes {stable_mosaic.version = 11 : i64} {
  func.func @_fused_kernel(%arg0: memref<2x4x16xf32, #tpu.memory_space<vmem>>, %arg1: memref<2x4x1xf32, #tpu.memory_space<vmem>>, %arg2: memref<2x4x1xf32, #tpu.memory_space<vmem>>, %arg3: memref<1x4x1xf32, #tpu.memory_space<vmem>>, %arg4: memref<1x4x1xf32, #tpu.memory_space<vmem>>, %arg5: memref<2x4x16xf32, #tpu.memory_space<vmem>>) attributes {dimension_semantics = [], scalar_prefetch = 0 : i64, scratch_operands = 0 : i64, tpu.core_type = #tpu.core_type<tc>} {
    %c0 = arith.constant 0 : index
    %c0_0 = arith.constant 0 : index
    %c0_1 = arith.constant 0 : index
    %0 = vector.load %arg0[%c0, %c0_0, %c0_1] : memref<2x4x16xf32, #tpu.memory_space<vmem>>, vector<2x4x16xf32>
    %cst = arith.constant dense<0.000000e+00> : vector<2x4xf32>
    %1 = vector.multi_reduction <add>, %0, %cst [2] : vector<2x4x16xf32> to vector<2x4xf32>
    %2 = vector.shape_cast %1 : vector<2x4xf32> to vector<2x4x1xf32>
    %cst_2 = arith.constant dense<0.000000e+00> : vector<4x1xf32>
    %3 = vector.multi_reduction <add>, %2, %cst_2 [0] : vector<2x4x1xf32> to vector<4x1xf32>
    %4 = vector.shape_cast %3 : vector<4x1xf32> to vector<1x4x1xf32>
    %cst_3 = arith.constant 3.125000e-02 : f32
    %5 = vector.broadcast %cst_3 : f32 to vector<1x4x1xf32>
    %6 = arith.mulf %4, %5 : vector<1x4x1xf32>
    %7 = vector.broadcast %6 : vector<1x4x1xf32> to vector<2x4x16xf32>
    %8 = arith.subf %0, %7 : vector<2x4x16xf32>
    %9 = arith.mulf %8, %8 : vector<2x4x16xf32>
    %cst_4 = arith.constant dense<0.000000e+00> : vector<2x4xf32>
    %10 = vector.multi_reduction <add>, %9, %cst_4 [2] : vector<2x4x16xf32> to vector<2x4xf32>
    %11 = vector.shape_cast %10 : vector<2x4xf32> to vector<2x4x1xf32>
    %cst_5 = arith.constant dense<0.000000e+00> : vector<4x1xf32>
    %12 = vector.multi_reduction <add>, %11, %cst_5 [0] : vector<2x4x1xf32> to vector<4x1xf32>
    %13 = vector.shape_cast %12 : vector<4x1xf32> to vector<1x4x1xf32>
    %cst_6 = arith.constant 3.125000e-02 : f32
    %14 = vector.broadcast %cst_6 : f32 to vector<1x4x1xf32>
    %15 = arith.mulf %13, %14 : vector<1x4x1xf32>
    %cst_7 = arith.constant 9.99999974E-6 : f32
    %16 = vector.broadcast %cst_7 : f32 to vector<1x4x1xf32>
    %17 = arith.addf %15, %16 : vector<1x4x1xf32>
    %18 = math.rsqrt %17 : vector<1x4x1xf32>
    %c0_8 = arith.constant 0 : index
    %c0_9 = arith.constant 0 : index
    %c0_10 = arith.constant 0 : index
    %19 = vector.load %arg3[%c0_8, %c0_9, %c0_10] : memref<1x4x1xf32, #tpu.memory_space<vmem>>, vector<1x4x1xf32>
    %20 = arith.mulf %19, %18 : vector<1x4x1xf32>
    %c0_11 = arith.constant 0 : index
    %c0_12 = arith.constant 0 : index
    %c0_13 = arith.constant 0 : index
    %21 = vector.load %arg1[%c0_11, %c0_12, %c0_13] : memref<2x4x1xf32, #tpu.memory_space<vmem>>, vector<2x4x1xf32>
    %c0_14 = arith.constant 0 : index
    %c0_15 = arith.constant 0 : index
    %c0_16 = arith.constant 0 : index
    %22 = vector.load %arg2[%c0_14, %c0_15, %c0_16] : memref<2x4x1xf32, #tpu.memory_space<vmem>>, vector<2x4x1xf32>
    %23 = vector.broadcast %20 : vector<1x4x1xf32> to vector<2x4x1xf32>
    %24 = arith.mulf %22, %23 : vector<2x4x1xf32>
    %25 = arith.addf %21, %24 : vector<2x4x1xf32>
    %c0_17 = arith.constant 0 : index
    %c0_18 = arith.constant 0 : index
    %c0_19 = arith.constant 0 : index
    %26 = vector.load %arg4[%c0_17, %c0_18, %c0_19] : memref<1x4x1xf32, #tpu.memory_space<vmem>>, vector<1x4x1xf32>
    %27 = arith.mulf %6, %20 : vector<1x4x1xf32>
    %28 = arith.subf %26, %27 : vector<1x4x1xf32>
    %29 = vector.broadcast %28 : vector<1x4x1xf32> to vector<2x4x1xf32>
    %30 = arith.mulf %22, %29 : vector<2x4x1xf32>
    %31 = vector.broadcast %25 : vector<2x4x1xf32> to vector<2x4x16xf32>
    %32 = arith.mulf %0, %31 : vector<2x4x16xf32>
    %33 = vector.broadcast %30 : vector<2x4x1xf32> to vector<2x4x16xf32>
    %34 = arith.addf %32, %33 : vector<2x4x16xf32>
    %c0_20 = arith.constant 0 : index
    %c0_21 = arith.constant 0 : index
    %c0_22 = arith.constant 0 : index
    %35 = vector.load %arg5[%c0_20, %c0_21, %c0_22] : memref<2x4x16xf32, #tpu.memory_space<vmem>>, vector<2x4x16xf32>
    tpu.vector_store %arg5[%c0_20, %c0_21, %c0_22], %34 {strides = array<i32>} : memref<2x4x16xf32, #tpu.memory_space<vmem>>, vector<2x4x16xf32>,
    return
  }
}

</mosaic_0001>

<llo_original>
// kernel: adaptive_batch_norm_1d.1
$region0: #{adaptive_batch_norm_1d.1}
  #allocation0 [shape = 'u32[]', space=smem, size = 0x4, offset = 0x4, fixed_abs, tag = 'smem constant byte address 0x4 - core index']
  #allocation1 [shape = 'u32[144,128]{1,0:T(1,128)}', space=vmem, size = 0x12000, scoped, tag = 'internal scratch']
  %s0 = inlined_call_operand.vmem [shape: f32[2,4,16], index: 0, kind: input, shape index: {}]
  %s1 = inlined_call_operand.vmem [shape: f32[2,4,1], index: 1, kind: input, shape index: {}]
  %s2 = inlined_call_operand.vmem [shape: f32[2,4,1], index: 2, kind: input, shape index: {}]
  %s3 = inlined_call_operand.vmem [shape: f32[1,4,1], index: 3, kind: input, shape index: {}]
  %s4 = inlined_call_operand.vmem [shape: f32[1,4,1], index: 4, kind: input, shape index: {}]
  %s5 = inlined_call_operand.hbm [shape: f32[2,4,16], index: 5, kind: output, shape index: {}]
  %s6 = sld [smem:[#allocation0]]
  $region30: #{adaptive_batch_norm_1d.1} parent=0
    _
  %s8 = ssub.s32 1, %s6
  %s9 = scalar_select 0, %s8, %s6
  $region1: #{adaptive_batch_norm_1d.1} parent=0
    #allocation2 [shape = 'u8[4096]{0}', space=vmem, size = 0x1000, scoped, tag = 'output window, operand 0, single buffered']
    #allocation3 [shape = 's32[1]{0}', space=sflag, size = 0x4, scoped, tag = 'scoped memory for adaptive_batch_norm_1d.1']
    %10 = vsyncpa [#allocation3], 0
    // Predicated region
    $region2: #{adaptive_batch_norm_1d.1} parent=1 // pred_check
      _
    $region3: #{adaptive_batch_norm_1d.1} parent=1 // pred_check_branch
      %12 = sbr.rel (0) target = $region5
    $region4: #{adaptive_batch_norm_1d.1} parent=1 // pred_region
      _
    $region5: #{adaptive_batch_norm_1d.1} parent=1 // pred_fallthru
      _
    // Predicated region
    $region6: #{adaptive_batch_norm_1d.1} parent=1 // pred_check
      _
    $region7: #{adaptive_batch_norm_1d.1} parent=1 // pred_check_branch
      %14 = sbr.rel (0) target = $region9
    $region8: #{adaptive_batch_norm_1d.1} parent=1 // pred_region
      _
    $region9: #{adaptive_batch_norm_1d.1} parent=1 // pred_fallthru
      _
    // Predicated region
    $region10: #{adaptive_batch_norm_1d.1} parent=1 // pred_check
      _
    $region11: #{adaptive_batch_norm_1d.1} parent=1 // pred_check_branch
      %16 = sbr.rel (0) target = $region13
    $region12: #{adaptive_batch_norm_1d.1} parent=1 // pred_region
      _
    $region13: #{adaptive_batch_norm_1d.1} parent=1 // pred_fallthru
      _
    // Predicated region
    $region14: #{adaptive_batch_norm_1d.1} parent=1 // pred_check
      _
    $region15: #{adaptive_batch_norm_1d.1} parent=1 // pred_check_branch
      %18 = sbr.rel (0) target = $region17
    $region16: #{adaptive_batch_norm_1d.1} parent=1 // pred_region
      _
    $region17: #{adaptive_batch_norm_1d.1} parent=1 // pred_fallthru
      _
    // Predicated region
    $region18: #{adaptive_batch_norm_1d.1} parent=1 // pred_check
      _
    $region19: #{adaptive_batch_norm_1d.1} parent=1 // pred_check_branch
      %20 = sbr.rel (0) target = $region21
    $region20: #{adaptive_batch_norm_1d.1} parent=1 // pred_region
      _
    $region21: #{adaptive_batch_norm_1d.1} parent=1 // pred_fallthru
      _
    %v21 = vld [vmem:[%s0] sm:$0xf]
    %v22 = vld [vmem:[%s0 + $0x4] sm:$0xf]
    %vm23 = vcmask 125952
    %v24 = vsel %vm23, %v21, 0.0
    %25 = vadd.xlane.f32.xlu0 %v24
    %v26 = vpop.xlane.xlu0 %25
    %v27 = vsel %vm23, %v22, 0.0
    %28 = vadd.xlane.f32.xlu0 %v27
    %v29 = vpop.xlane.xlu0 %28
    %vm30 = vcmask 1043456
    %v31 = vsel %vm30, %v26, 0.0
    %v32 = vsel %vm30, %v29, 0.0
    %v33 = vadd.f32 %v31, %v32
    %v34 = vmul.f32 %v33, 0.03125
    %v35 = vsub.f32 %v21, %v34
    %v36 = vsub.f32 %v22, %v34
    %v37 = vmul.f32 %v35, %v35
    %v38 = vmul.f32 %v36, %v36
    %v39 = vsel %vm23, %v37, 0.0
    %40 = vadd.xlane.f32.xlu0 %v39
    %v41 = vpop.xlane.xlu0 %40
    %v42 = vsel %vm23, %v38, 0.0
    %43 = vadd.xlane.f32.xlu0 %v42
    %v44 = vpop.xlane.xlu0 %43
    %v45 = vsel %vm30, %v41, 0.0
    %v46 = vsel %vm30, %v44, 0.0
    %v47 = vadd.f32 %v45, %v46
    %v48 = vmul.f32 %v47, 0.03125
    %v49 = vadd.f32 %v48, 1e-05
    %v50 = vrsqrt.pop %v49
    %v51 = vld [vmem:[%s3] sm:$0xf]
    %v52 = vmul.f32 %v51, %v50
    %v53 = vld [vmem:[%s1] sm:$0xf]
    %v54 = vld [vmem:[%s1 + $0x4] sm:$0xf]
    %v55 = vld [vmem:[%s2] sm:$0xf]
    %v56 = vld [vmem:[%s2 + $0x4] sm:$0xf]
    %v57 = vmul.f32 %v55, %v52
    %v58 = vmul.f32 %v56, %v52
    %v59 = vadd.f32 %v53, %v57
    %v60 = vadd.f32 %v54, %v58
    %v61 = vld [vmem:[%s4] sm:$0xf]
    %v62 = vmul.f32 %v34, %v52
    %v63 = vsub.f32 %v61, %v62
    %v64 = vmul.f32 %v55, %v63
    %v65 = vmul.f32 %v56, %v63
    %67 = vset.pattern.permute.xlu0 0
    %68 = vperm.xlu0 %67, %v59
    %v69 = vpop.permute.xlu0 %68
    %72 = vset.pattern.permute.xlu0 0
    %73 = vperm.xlu0 %72, %v60
    %v74 = vpop.permute.xlu0 %73
    %v76 = vmul.f32 %v21, %v69
    %v77 = vmul.f32 %v22, %v74
    %79 = vset.pattern.permute.xlu0 0
    %80 = vperm.xlu0 %79, %v64
    %v81 = vpop.permute.xlu0 %80
    %84 = vset.pattern.permute.xlu0 0
    %85 = vperm.xlu0 %84, %v65
    %v86 = vpop.permute.xlu0 %85
    %v88 = vadd.f32 %v76, %v81
    %v89 = vadd.f32 %v77, %v86
    %90 = vst.msk [vmem:[#allocation2] sm:$0xf] %vm23, %v88
    %91 = vst.msk [vmem:[#allocation2 + $0x4] sm:$0xf] %vm23, %v89
    // Predicated region
    $region22: #{adaptive_batch_norm_1d.1} parent=1 // pred_check
      _
    $region23: #{adaptive_batch_norm_1d.1} parent=1 // pred_check_branch
      %93 = sbr.rel (0) target = $region25
    $region24: #{adaptive_batch_norm_1d.1} parent=1 // pred_region
      %s95 = ssub.s32 128, 128
      %96 = vsyncadd [#allocation3], %s95
      %s97 = sshll.u32 [#allocation2], 4
      %s98 = int_to_ptr.vmem [resolvable:$true] %s97
      %103 = dma.vmem_to_hbm [thread:$0]  %s98, 128, %s5, [#allocation3], 64, 64, 4
    $region25: #{adaptive_batch_norm_1d.1} parent=1 // pred_fallthru
      _
    // Predicated region
    $region26: #{adaptive_batch_norm_1d.1} parent=1 // pred_check
      _
    $region27: #{adaptive_batch_norm_1d.1} parent=1 // pred_check_branch
      %105 = sbr.rel (0) target = $region29
    $region28: #{adaptive_batch_norm_1d.1} parent=1 // pred_region
      %106 = dma.done [#allocation3], 128
    $region29: #{adaptive_batch_norm_1d.1} parent=1 // pred_fallthru
      _
    %107 = vsyncpa [#allocation3], 1

</llo_original>
